<compile_context>
chip_gen: v7x
topology: tpu7x:2x2x1
jax: 0.10.0
libtpu: 0.0.40
codegen_flags: <defaults>
</compile_context>

<pallas_src>
import functools

import jax
import jax.numpy as jnp
import numpy as np
from jax import lax
from jax.experimental import pallas as pl
from jax.experimental.pallas import tpu as pltpu

_LANE = 128
_MIB = 1 << 20


def _round_up(x, m):
    return ((x + m - 1) // m) * m


def _prototype_math(support, targets, n_way, n_way_padded, eps):
    """Prototype means (transposed, f32) and the f32 scale row 10/||proto||."""
    ns = support.shape[0]
    class_ids = lax.broadcasted_iota(jnp.int32, (ns, n_way_padded), 1)
    onehot_b = targets == class_ids                          # [Ns, NWP] bool
    onehot = onehot_b.astype(support.dtype)                  # exact 0/1 in MXU dtype
    # proto_sum[d, c] = sum_i support[i, d] * onehot[i, c]   (f32 accumulation on MXU)
    proto_sum = lax.dot_general(
        support, onehot, (((0,), (0,)), ((), ())),
        preferred_element_type=jnp.float32)                  # [D, NWP]
    counts = jnp.sum(onehot_b.astype(jnp.float32), axis=0, keepdims=True)   # [1, NWP]
    col = lax.broadcasted_iota(jnp.int32, (1, n_way_padded), 1)
    # Padded (unused) class columns get count 1 so they stay finite zeros; real
    # classes with zero support still yield NaN, matching torch's mean of [].
    counts = jnp.where(col < n_way, counts, 1.0)
    protos = proto_sum / counts                              # f32 [D, NWP]
    inv_p = lax.rsqrt(jnp.maximum(
        jnp.sum(protos * protos, axis=0, keepdims=True), eps * eps))        # [1, NWP] (EUP)
    return protos, inv_p * 10.0


def _proto_kernel(support_ref, targets_ref, phat_ref, pscale_ref, *,
                  n_way, n_way_padded, eps):
    protos, pscale = _prototype_math(
        support_ref[...], targets_ref[...], n_way, n_way_padded, eps)
    phat_ref[...] = protos.astype(phat_ref.dtype)            # matmul operand dtype
    pscale_ref[...] = pscale                                  # f32 epilogue scale


def _logits_kernel(query_ref, phat_ref, pscale_ref, out_ref, *, eps):
    query = query_ref[...]                                    # [TQ, D]
    qf = query.astype(jnp.float32)
    inv_q = lax.rsqrt(jnp.maximum(
        jnp.sum(qf * qf, axis=-1, keepdims=True), eps * eps))  # [TQ, 1]  (EUP)
    dots = jnp.dot(query, phat_ref[...],
                   preferred_element_type=jnp.float32)         # [TQ, NWP] (MXU)
    out_ref[...] = (dots * inv_q * pscale_ref[...]).astype(out_ref.dtype)


def _fused_kernel(support_ref, targets_ref, query_ref, out_ref, *,
                  n_way, n_way_padded, eps):
    protos, pscale = _prototype_math(
        support_ref[...], targets_ref[...], n_way, n_way_padded, eps)
    query = query_ref[...]
    qf = query.astype(jnp.float32)
    inv_q = lax.rsqrt(jnp.maximum(
        jnp.sum(qf * qf, axis=-1, keepdims=True), eps * eps))
    dots = jnp.dot(query, protos.astype(query.dtype),
                   preferred_element_type=jnp.float32)
    out_ref[...] = (dots * inv_q * pscale).astype(out_ref.dtype)


def protonet_head_pallas(support_embeddings, support_targets, query_embeddings, n_way,
                         *, tile_q=512, compute_dtype=None, eps=1e-8):
    """support_embeddings: [Ns, D], support_targets: [Ns] int, query_embeddings: [Nq, D]."""
    ns, d = support_embeddings.shape
    nq, dq = query_embeddings.shape
    assert d == dq
    n_way = int(n_way)
    nwp = _round_up(max(n_way, 1), _LANE)                 # lane-dense class dimension

    out_dtype = jnp.dtype(query_embeddings.dtype)
    # Optional bf16 streaming for f32 inputs (halves the dominant HBM stream of a
    # memory-bound kernel); default keeps the input dtype so f32 stays f32-exact.
    mm_dtype = jnp.dtype(compute_dtype) if compute_dtype is not None else out_dtype
    in_bytes = mm_dtype.itemsize
    out_bytes = out_dtype.itemsize

    support = (support_embeddings if support_embeddings.dtype == mm_dtype
               else support_embeddings.astype(mm_dtype))
    query = (query_embeddings if query_embeddings.dtype == mm_dtype
             else query_embeddings.astype(mm_dtype))
    targets2d = support_targets.astype(jnp.int32).reshape(ns, 1)

    def vmem_limit(need_bytes):
        # Explicit scoped-VMEM limit (v5e default is only 16 MiB); capped well
        # under v7x's 64 MiB physical per-core budget.
        return int(min(40 * _MIB, max(32 * _MIB, need_bytes + 8 * _MIB)))

    # Rough VMEM footprint of the un-gridded prototype math (support, one-hot,
    # f32 accumulator + intermediates); 2x margin for compiler temporaries.
    proto_bytes = 2 * (ns * d * in_bytes + ns * nwp * (in_bytes + 4) + d * nwp * 4)
    # TODO(synk): tile stage 1 over Ns with an f32 accumulator if support sets grow
    # beyond a few thousand rows (proto_bytes approaching the scoped-VMEM limit).

    cost = pl.CostEstimate(
        flops=int(2 * nq * d * nwp + 2 * ns * d * nwp),
        transcendentals=int(nq + nwp),
        bytes_accessed=int((nq * d + ns * d) * in_bytes + ns * 4
                           + nq * nwp * out_bytes))

    fuse_row_limit = max(int(tile_q), 512)
    fused_bytes = proto_bytes + 2 * (nq * d * in_bytes + nq * nwp * (4 + out_bytes))
    if nq <= fuse_row_limit and fused_bytes <= 24 * _MIB:
        # ---- fused single-call path (common few-shot episode sizes) ----
        out = pl.pallas_call(
            functools.partial(_fused_kernel, n_way=n_way, n_way_padded=nwp, eps=eps),
            out_shape=jax.ShapeDtypeStruct((nq, nwp), out_dtype),
            in_specs=[pl.BlockSpec(memory_space=pltpu.MemorySpace.VMEM)] * 3,
            out_specs=pl.BlockSpec(memory_space=pltpu.MemorySpace.VMEM),
            compiler_params=pltpu.CompilerParams(
                vmem_limit_bytes=vmem_limit(fused_bytes)),
            cost_estimate=cost,
        )(support, targets2d, query)
        return out[:, :n_way]

    # ---- stage 1: prototype means [D, NWP] + f32 scale row [1, NWP] ----
    phat, pscale = pl.pallas_call(
        functools.partial(_proto_kernel, n_way=n_way, n_way_padded=nwp, eps=eps),
        out_shape=(jax.ShapeDtypeStruct((d, nwp), mm_dtype),
                   jax.ShapeDtypeStruct((1, nwp), jnp.float32)),
        in_specs=[pl.BlockSpec(memory_space=pltpu.MemorySpace.VMEM)] * 2,
        out_specs=(pl.BlockSpec(memory_space=pltpu.MemorySpace.VMEM),
                   pl.BlockSpec(memory_space=pltpu.MemorySpace.VMEM)),
        compiler_params=pltpu.CompilerParams(
            vmem_limit_bytes=vmem_limit(proto_bytes)),
    )(support, targets2d)

    # ---- stage 2: tiled, pipelined query matmul over a ragged 1-D Nq grid ----
    # >=2 grid steps whenever Nq exceeds one tile (v7x megacore sharding of the
    # "parallel" axis), tiles kept as multiples of 128, shrunk if over budget.
    tq = max(_LANE, min(int(tile_q), _round_up(pl.cdiv(nq, 2), _LANE)))
    tq = _round_up(tq, _LANE)

    def stage2_bytes(t):
        return (2 * t * d * in_bytes            # double-buffered query tiles
                + 2 * t * nwp * out_bytes       # double-buffered output tiles
                + 2 * d * nwp * in_bytes        # resident prototypes
                + 2 * nwp * 4)                  # resident scale row

    while tq > _LANE and stage2_bytes(tq) > 24 * _MIB:
        tq = _round_up(tq // 2, _LANE)

    out = pl.pallas_call(
        functools.partial(_logits_kernel, eps=eps),
        out_shape=jax.ShapeDtypeStruct((nq, nwp), out_dtype),
        grid_spec=pltpu.PrefetchScalarGridSpec(
            num_scalar_prefetch=0,
            grid=(pl.cdiv(nq, tq),),                            # ragged last tile OK
            in_specs=[
                pl.BlockSpec((tq, d), lambda i: (i, 0)),        # streamed query tiles
                pl.BlockSpec((d, nwp), lambda i: (0, 0)),       # resident prototypes
                pl.BlockSpec((1, nwp), lambda i: (0, 0)),       # resident f32 scale
            ],
            out_specs=pl.BlockSpec((tq, nwp), lambda i: (i, 0)),
        ),
        compiler_params=pltpu.CompilerParams(
            dimension_semantics=("parallel",),
            vmem_limit_bytes=vmem_limit(stage2_bytes(tq))),
        cost_estimate=cost,
    )(query, phat, pscale)

    return out[:, :n_way]


def protonet_head_forward(support_embeddings, support_targets, query_embeddings, query_targets):
    # n_way from unique query targets (host-side / static, like torch's .unique()).
    n_way = int(np.unique(np.asarray(query_targets)).shape[0])
    return protonet_head_pallas(support_embeddings, support_targets, query_embeddings, n_way)


def _reference(support_embeddings, support_targets, query_embeddings, n_way, eps=1e-8):
    se = np.asarray(support_embeddings, dtype=np.float32)
    st = np.asarray(support_targets)
    qe = np.asarray(query_embeddings, dtype=np.float32)
    protos = np.zeros((n_way, se.shape[-1]), dtype=np.float32)
    for c in range(n_way):
        protos[c] = se[st == c].mean(0)
    qn = np.maximum(np.linalg.norm(qe, axis=-1, keepdims=True), eps)          # [Nq,1]
    pn = np.maximum(np.linalg.norm(protos, axis=-1, keepdims=True), eps)      # [n_way,1]
    return (qe @ protos.T) / (qn * pn.T) * 10.0


if __name__ == "__main__":
    key = jax.random.PRNGKey(0)
    k1, k2, k3, k4 = jax.random.split(key, 4)

    # Case 1: classic few-shot episode -> fused single-call path.
    n_way, n_shot, n_query, d = 5, 5, 75, 64
    support = jax.random.normal(k1, (n_way * n_shot, d), dtype=jnp.float32)
    s_tgts = jnp.repeat(jnp.arange(n_way, dtype=jnp.int32), n_shot)
    queries = jax.random.normal(k2, (n_query, d), dtype=jnp.float32)
    q_tgts = jnp.arange(n_query, dtype=jnp.int32) % n_way      # all classes present

    logits = jax.block_until_ready(
        protonet_head_forward(support, s_tgts, queries, q_tgts))
    ref = _reference(support, s_tgts, queries, n_way)
    np.testing.assert_allclose(np.asarray(logits), ref, rtol=1e-4, atol=1e-4)

    # Case 2: larger query set -> two-stage tiled path with a ragged last tile.
    n_way2, n_shot2, n_query2, d2 = 4, 4, 1100, 32
    support2 = jax.random.normal(k3, (n_way2 * n_shot2, d2), dtype=jnp.float32)
    s_tgts2 = jnp.repeat(jnp.arange(n_way2, dtype=jnp.int32), n_shot2)
    queries2 = jax.random.normal(k4, (n_query2, d2), dtype=jnp.float32)
    q_tgts2 = jnp.arange(n_query2, dtype=jnp.int32) % n_way2

    logits2 = jax.block_until_ready(
        protonet_head_forward(support2, s_tgts2, queries2, q_tgts2))
    ref2 = _reference(support2, s_tgts2, queries2, n_way2)
    np.testing.assert_allclose(np.asarray(logits2), ref2, rtol=1e-4, atol=1e-4)

    print("KERNEL_OK")
</pallas_src>

<mosaic_0001>
module attributes {stable_mosaic.version = 11 : i64} {
  func.func @_fused_kernel(%arg0: memref<25x64xf32, #tpu.memory_space<vmem>>, %arg1: memref<25x1xi32, #tpu.memory_space<vmem>>, %arg2: memref<75x64xf32, #tpu.memory_space<vmem>>, %arg3: memref<75x128xf32, #tpu.memory_space<vmem>>) attributes {dimension_semantics = [], scalar_prefetch = 0 : i64, scratch_operands = 0 : i64, tpu.core_type = #tpu.core_type<tc>} {
    %c0 = arith.constant 0 : index
    %c0_0 = arith.constant 0 : index
    %0 = vector.load %arg0[%c0, %c0_0] : memref<25x64xf32, #tpu.memory_space<vmem>>, vector<25x64xf32>
    %c0_1 = arith.constant 0 : index
    %c0_2 = arith.constant 0 : index
    %1 = vector.load %arg1[%c0_1, %c0_2] : memref<25x1xi32, #tpu.memory_space<vmem>>, vector<25x1xi32>
    %2 = tpu.iota {dimensions = array<i32: 1>} : vector<25x128xi32>
    %3 = vector.broadcast %1 : vector<25x1xi32> to vector<25x128xi32>
    %4 = arith.cmpi eq, %3, %2 : vector<25x128xi32>
    %5 = arith.extui %4 : vector<25x128xi1> to vector<25x128xi32>
    %6 = arith.sitofp %5 : vector<25x128xi32> to vector<25x128xf32>
    %cst = arith.constant dense<0.000000e+00> : vector<64x128xf32>
    %7 = tpu.matmul %0, %6, %cst {dimension_numbers = #tpu.dot_dimension_numbers<[0], [0], [1], [1], [0, 1, 1, 1], [], []>} : vector<25x64xf32>, vector<25x128xf32>, vector<64x128xf32> -> vector<64x128xf32>
    %8 = arith.extui %4 : vector<25x128xi1> to vector<25x128xi32>
    %9 = arith.sitofp %8 : vector<25x128xi32> to vector<25x128xf32>
    %cst_3 = arith.constant dense<0.000000e+00> : vector<128xf32>
    %10 = vector.multi_reduction <add>, %9, %cst_3 [0] : vector<25x128xf32> to vector<128xf32>
    %11 = vector.shape_cast %10 : vector<128xf32> to vector<1x128xf32>
    %12 = tpu.iota {dimensions = array<i32: 1>} : vector<1x128xi32>
    %c5_i32 = arith.constant 5 : i32
    %13 = vector.broadcast %c5_i32 : i32 to vector<1x128xi32>
    %14 = arith.cmpi slt, %12, %13 : vector<1x128xi32>
    %cst_4 = arith.constant 1.000000e+00 : f32
    %15 = vector.broadcast %cst_4 : f32 to vector<1x128xf32>
    %16 = arith.select %14, %11, %15 : vector<1x128xi1>, vector<1x128xf32>
    %17 = vector.broadcast %16 : vector<1x128xf32> to vector<64x128xf32>
    %18 = arith.divf %7, %17 : vector<64x128xf32>
    %19 = arith.mulf %18, %18 : vector<64x128xf32>
    %cst_5 = arith.constant dense<0.000000e+00> : vector<128xf32>
    %20 = vector.multi_reduction <add>, %19, %cst_5 [0] : vector<64x128xf32> to vector<128xf32>
    %21 = vector.shape_cast %20 : vector<128xf32> to vector<1x128xf32>
    %cst_6 = arith.constant 1.000000e-16 : f32
    %22 = vector.broadcast %cst_6 : f32 to vector<1x128xf32>
    %23 = arith.maximumf %21, %22 : vector<1x128xf32>
    %24 = math.rsqrt %23 : vector<1x128xf32>
    %cst_7 = arith.constant 1.000000e+01 : f32
    %25 = vector.broadcast %cst_7 : f32 to vector<1x128xf32>
    %26 = arith.mulf %24, %25 : vector<1x128xf32>
    %c0_8 = arith.constant 0 : index
    %c0_9 = arith.constant 0 : index
    %27 = vector.load %arg2[%c0_8, %c0_9] : memref<75x64xf32, #tpu.memory_space<vmem>>, vector<75x64xf32>
    %28 = arith.mulf %27, %27 : vector<75x64xf32>
    %cst_10 = arith.constant dense<0.000000e+00> : vector<75xf32>
    %29 = vector.multi_reduction <add>, %28, %cst_10 [1] : vector<75x64xf32> to vector<75xf32>
    %30 = vector.shape_cast %29 : vector<75xf32> to vector<75x1xf32>
    %cst_11 = arith.constant 1.000000e-16 : f32
    %31 = vector.broadcast %cst_11 : f32 to vector<75x1xf32>
    %32 = arith.maximumf %30, %31 : vector<75x1xf32>
    %33 = math.rsqrt %32 : vector<75x1xf32>
    %cst_12 = arith.constant dense<0.000000e+00> : vector<75x128xf32>
    %34 = tpu.matmul %27, %18, %cst_12 {dimension_numbers = #tpu.dot_dimension_numbers<[1], [0], [0], [1], [0, 0, 1, 1], [], []>} : vector<75x64xf32>, vector<64x128xf32>, vector<75x128xf32> -> vector<75x128xf32>
    %35 = vector.broadcast %33 : vector<75x1xf32> to vector<75x128xf32>
    %36 = arith.mulf %34, %35 : vector<75x128xf32>
    %37 = vector.broadcast %26 : vector<1x128xf32> to vector<75x128xf32>
    %38 = arith.mulf %36, %37 : vector<75x128xf32>
    %c0_13 = arith.constant 0 : index
    %c0_14 = arith.constant 0 : index
    %39 = vector.load %arg3[%c0_13, %c0_14] : memref<75x128xf32, #tpu.memory_space<vmem>>, vector<75x128xf32>
    tpu.vector_store %arg3[%c0_13, %c0_14], %38 {strides = array<i32>} : memref<75x128xf32, #tpu.memory_space<vmem>>, vector<75x128xf32>,
    return
  }
}

</mosaic_0001>

<llo_original>
// kernel: tpu_custom_call.1
$region0: #{tpu_custom_call.1}
  #allocation0 [shape = 'u32[]', space=smem, size = 0x4, offset = 0x4, fixed_abs, tag = 'smem constant byte address 0x4 - core index']
  #allocation1 [shape = 'u32[144,128]{1,0:T(1,128)}', space=vmem, size = 0x12000, scoped, tag = 'internal scratch']
  %s0 = inlined_call_operand.vmem [shape: f32[25,64], index: 0, kind: input, shape index: {}]
  %s1 = inlined_call_operand.vmem [shape: s32[25,1], index: 1, kind: input, shape index: {}]
  %s2 = inlined_call_operand.vmem [shape: f32[75,64], index: 2, kind: input, shape index: {}]
  %s3 = inlined_call_operand.hbm [shape: f32[75,128], index: 3, kind: output, shape index: {}]
  %s4 = sld [smem:[#allocation0]]
  $region22: #{tpu_custom_call.1} parent=0
    _
  %s6 = ssub.s32 1, %s4
  %s7 = scalar_select 0, %s6, %s4
  $region1: #{tpu_custom_call.1} parent=0
    #allocation2 [shape = 'u8[40960]{0}', space=vmem, size = 0xa000, scoped, tag = 'output window, operand 0, single buffered']
    #allocation3 [shape = 's32[1]{0}', space=sflag, size = 0x4, scoped, tag = 'scoped memory for tpu_custom_call.1']
    %8 = vsyncpa [#allocation3], 0
    // Predicated region
    $region2: #{tpu_custom_call.1} parent=1 // pred_check
      _
    $region3: #{tpu_custom_call.1} parent=1 // pred_check_branch
      %10 = sbr.rel (0) target = $region5
    $region4: #{tpu_custom_call.1} parent=1 // pred_region
      _
    $region5: #{tpu_custom_call.1} parent=1 // pred_fallthru
      _
    // Predicated region
    $region6: #{tpu_custom_call.1} parent=1 // pred_check
      _
    $region7: #{tpu_custom_call.1} parent=1 // pred_check_branch
      %12 = sbr.rel (0) target = $region9
    $region8: #{tpu_custom_call.1} parent=1 // pred_region
      _
    $region9: #{tpu_custom_call.1} parent=1 // pred_fallthru
      _
    // Predicated region
    $region10: #{tpu_custom_call.1} parent=1 // pred_check
      _
    $region11: #{tpu_custom_call.1} parent=1 // pred_check_branch
      %14 = sbr.rel (0) target = $region13
    $region12: #{tpu_custom_call.1} parent=1 // pred_region
      _
    $region13: #{tpu_custom_call.1} parent=1 // pred_fallthru
      _
    %v15 = vld [vmem:[%s0] sm:$0xff]
    %v16 = vld [vmem:[%s0 + $0x8] sm:$0xff]
    %v17 = vld [vmem:[%s0 + $0x10] sm:$0xff]
    %v18 = vld [vmem:[%s0 + $0x18] sm:$0x1]
    %v19 = vld [vmem:[%s1] sm:$0xff]
    %v20 = vld [vmem:[%s1 + $0x8] sm:$0xff]
    %v21 = vld [vmem:[%s1 + $0x10] sm:$0xff]
    %v22 = vld [vmem:[%s1 + $0x18] sm:$0x1]
    %v23 = vlaneseq
    %v24 = vand.u32 %v23, 127
    %25 = vset.pattern.permute.xlu0 0
    %26 = vperm.xlu0 %25, %v19
    %v27 = vpop.permute.xlu0 %26
    %28 = vset.pattern.permute.xlu0 0
    %29 = vperm.xlu0 %28, %v20
    %v30 = vpop.permute.xlu0 %29
    %31 = vset.pattern.permute.xlu0 0
    %32 = vperm.xlu0 %31, %v21
    %v33 = vpop.permute.xlu0 %32
    %34 = vset.pattern.permute.xlu0 0
    %35 = vperm.xlu0 %34, %v22
    %v36 = vpop.permute.xlu0 %35
    %vm37 = vcmp.eq.s32.totalorder %v27, %v24
    %vm38 = vcmp.eq.s32.totalorder %v30, %v24
    %vm39 = vcmp.eq.s32.totalorder %v33, %v24
    %vm40 = vcmp.eq.s32.totalorder %v36, %v24
    %v41 = vsel %vm37, 1, 0
    %v42 = vsel %vm38, 1, 0
    %v43 = vsel %vm39, 1, 0
    %v44 = vsel %vm40, 1, 0
    %v45 = vcvt.s32.f32 %v41
    %v46 = vcvt.s32.f32 %v42
    %v47 = vcvt.s32.f32 %v43
    %v48 = vcvt.s32.f32 %v44
    %49 = vxpose.xlu0.b32.start [1/16] %v15, 128
    %50 = vxpose.xlu0.b32.cont [2/16] %v16, 128
    %51 = vxpose.xlu0.b32.cont [3/16] %v17, 128
    %52 = vxpose.xlu0.b32.cont [4/16] %v18, 128
    %53 = vxpose.xlu0.b32.cont [5/16] 0.0, 128
    %54 = vxpose.xlu0.b32.cont [6/16] 0.0, 128
    %55 = vxpose.xlu0.b32.cont [7/16] 0.0, 128
    %56 = vxpose.xlu0.b32.cont [8/16] 0.0, 128
    %57 = vxpose.xlu0.b32.cont [9/16] 0.0, 128
    %58 = vxpose.xlu0.b32.cont [10/16] 0.0, 128
    %59 = vxpose.xlu0.b32.cont [11/16] 0.0, 128
    %60 = vxpose.xlu0.b32.cont [12/16] 0.0, 128
    %61 = vxpose.xlu0.b32.cont [13/16] 0.0, 128
    %62 = vxpose.xlu0.b32.cont [14/16] 0.0, 128
    %63 = vxpose.xlu0.b32.cont [15/16] 0.0, 128
    %64 = vxpose.xlu0.b32.end [16/16] 0.0, 128
    %v65 = vpop.trf.xlu0
    %v66 = vpop.trf.xlu0
    %v67 = vpop.trf.xlu0
    %v68 = vpop.trf.xlu0
    %v69 = vpop.trf.xlu0
    %v70 = vpop.trf.xlu0
    %v71 = vpop.trf.xlu0
    %v72 = vpop.trf.xlu0
    %v73 = vpop.trf.xlu0
    %v74 = vpop.trf.xlu0
    %v75 = vpop.trf.xlu0
    %v76 = vpop.trf.xlu0
    %v77 = vpop.trf.xlu0
    %v78 = vpop.trf.xlu0
    %v79 = vpop.trf.xlu0
    %v80 = vpop.trf.xlu0
    %vm81 = vcmask 203776
    %v83 = vsel %vm81, %v65, 0
    %v86 = vsel %vm81, %v66, 0
    %v89 = vsel %vm81, %v67, 0
    %v92 = vsel %vm81, %v68, 0
    %v95 = vsel %vm81, %v69, 0
    %v98 = vsel %vm81, %v70, 0
    %v101 = vsel %vm81, %v71, 0
    %v104 = vsel %vm81, %v72, 0
    %vm106 = vcmask 1040384
    %v108 = vsel %vm106, %v48, 0
    %110 = vmatprep.subr.mxu0 0.0
    %111 = vmatpush1.msra.mxu0 %v45
    %112 = vmatprep.subr.mxu0 0.0
    %113 = vmatpush1.msra.mxu0 %v46
    %114 = vmatprep.subr.mxu0 0.0
    %115 = vmatpush1.msra.mxu0 %v47
    %116 = vmatprep.subr.mxu0 0.0
    %117 = vmatpush1.msra.mxu0 %v108
    %118 = vmatprep.subr.mxu0 0.0
    %119 = vmatpush1.msra.mxu0 0.0
    %120 = vmatprep.subr.mxu0 0.0
    %121 = vmatpush1.msra.mxu0 0.0
    %122 = vmatprep.subr.mxu0 0.0
    %123 = vmatpush1.msra.mxu0 0.0
    %124 = vmatprep.subr.mxu0 0.0
    %125 = vmatpush1.msra.mxu0 0.0
    %126 = vmatprep.subr.mxu0 0.0
    %127 = vmatpush1.msra.mxu0 0.0
    %128 = vmatprep.subr.mxu0 0.0
    %129 = vmatpush1.msra.mxu0 0.0
    %130 = vmatprep.subr.mxu0 0.0
    %131 = vmatpush1.msra.mxu0 0.0
    %132 = vmatprep.subr.mxu0 0.0
    %133 = vmatpush1.msra.mxu0 0.0
    %134 = vmatprep.subr.mxu0 0.0
    %135 = vmatpush1.msra.mxu0 0.0
    %136 = vmatprep.subr.mxu0 0.0
    %137 = vmatpush1.msra.mxu0 0.0
    %138 = vmatprep.subr.mxu0 0.0
    %139 = vmatpush1.msra.mxu0 0.0
    %140 = vmatprep.subr.mxu0 0.0
    %141 = vmatpush1.msra.mxu0 0.0
    %142 = vmatprep.subr.mxu0 0.0
    %143 = vmatpush1.msra.mxu0 0.0
    %144 = vmatprep.subr.mxu0 0.0
    %145 = vmatpush1.msra.mxu0 0.0
    %146 = vmatprep.subr.mxu0 0.0
    %147 = vmatpush1.msra.mxu0 0.0
    %148 = vmatprep.subr.mxu0 0.0
    %149 = vmatpush1.msra.mxu0 0.0
    %150 = vmatprep.subr.mxu0 0.0
    %151 = vmatpush1.msra.mxu0 0.0
    %152 = vmatprep.subr.mxu0 0.0
    %153 = vmatpush1.msra.mxu0 0.0
    %154 = vmatprep.subr.mxu0 0.0
    %155 = vmatpush1.msra.mxu0 0.0
    %156 = vmatprep.subr.mxu0 0.0
    %157 = vmatpush1.msra.mxu0 0.0
    %158 = vmatprep.subr.mxu0 0.0
    %159 = vmatpush1.msra.mxu0 0.0
    %160 = vmatprep.subr.mxu0 0.0
    %161 = vmatpush1.msra.mxu0 0.0
    %162 = vmatprep.subr.mxu0 0.0
    %163 = vmatpush1.msra.mxu0 0.0
    %164 = vmatprep.subr.mxu0 0.0
    %165 = vmatpush1.msra.mxu0 0.0
    %166 = vmatprep.subr.mxu0 0.0
    %167 = vmatpush1.msra.mxu0 0.0
    %168 = vmatprep.subr.mxu0 0.0
    %169 = vmatpush1.msra.mxu0 0.0
    %170 = vmatprep.subr.mxu0 0.0
    %171 = vmatpush1.msra.mxu0 0.0
    %172 = vmatprep.subr.mxu0 0.0
    %173 = vmatpush1.msra.mxu0 0.0
    %174 = vmatprep.mubr.f32.mxu0 0.0
    %175 = vmatmul.mubr.f32.gmra.mrb[0].mxu0 %v83
    %v176 = vpop.f32.mrb[0].mxu0
    %v177 = vadd.f32 0.0, %v176
    %v178 = vpop.f32.mrb[0].mxu0
    %179 = vmatprep.mubr.f32.mxu0 0.0
    %180 = vmatmul.mubr.f32.gmra.mrb[0].mxu0 %v86
    %v181 = vpop.f32.mrb[0].mxu0
    %v182 = vadd.f32 0.0, %v181
    %v183 = vpop.f32.mrb[0].mxu0
    %184 = vmatprep.mubr.f32.mxu0 0.0
    %185 = vmatmul.mubr.f32.gmra.mrb[0].mxu0 %v89
    %v186 = vpop.f32.mrb[0].mxu0
    %v187 = vadd.f32 0.0, %v186
    %v188 = vpop.f32.mrb[0].mxu0
    %189 = vmatprep.mubr.f32.mxu0 0.0
    %190 = vmatmul.mubr.f32.gmra.mrb[0].mxu0 %v92
    %v191 = vpop.f32.mrb[0].mxu0
    %v192 = vadd.f32 0.0, %v191
    %v193 = vpop.f32.mrb[0].mxu0
    %194 = vmatprep.mubr.f32.mxu0 0.0
    %195 = vmatmul.mubr.f32.gmra.mrb[0].mxu0 %v95
    %v196 = vpop.f32.mrb[0].mxu0
    %v197 = vadd.f32 0.0, %v196
    %v198 = vpop.f32.mrb[0].mxu0
    %199 = vmatprep.mubr.f32.mxu0 0.0
    %200 = vmatmul.mubr.f32.gmra.mrb[0].mxu0 %v98
    %v201 = vpop.f32.mrb[0].mxu0
    %v202 = vadd.f32 0.0, %v201
    %v203 = vpop.f32.mrb[0].mxu0
    %204 = vmatprep.mubr.f32.mxu0 0.0
    %205 = vmatmul.mubr.f32.gmra.mrb[0].mxu0 %v101
    %v206 = vpop.f32.mrb[0].mxu0
    %v207 = vadd.f32 0.0, %v206
    %v208 = vpop.f32.mrb[0].mxu0
    %209 = vmatprep.mubr.f32.mxu0 0.0
    %210 = vmatmul.mubr.f32.gmra.mrb[0].mxu0 %v104
    %v211 = vpop.f32.mrb[0].mxu0
    %v212 = vadd.f32 0.0, %v211
    %v213 = vpop.f32.mrb[0].mxu0
    %214 = vdwg.mxu0
    %v215 = vadd.f32 %v45, %v46
    %v216 = vadd.f32 %v215, %v47
    %v217 = vsel %vm106, %v48, 0.0
    %v218 = vadd.f32 %v216, %v217
    %v219 = vrot.slane %v218, 4
    %v220 = vadd.f32 %v218, %v219
    %v221 = vrot.slane %v220, 2
    %v222 = vadd.f32 %v220, %v221
    %v223 = vrot.slane %v222, 1
    %v224 = vadd.f32 %v222, %v223
    %vm225 = vcmp.lt.s32.totalorder %v24, 5
    %v226 = vsel %vm225, %v224, 1.0
    %v227 = vrcp.pop %v226
    %v228 = vmul.f32 %v177, %v227
    %v229 = vmul.f32 %v182, %v227
    %v230 = vmul.f32 %v187, %v227
    %v231 = vmul.f32 %v192, %v227
    %v232 = vmul.f32 %v197, %v227
    %v233 = vmul.f32 %v202, %v227
    %v234 = vmul.f32 %v207, %v227
    %v235 = vmul.f32 %v212, %v227
    %v236 = vmul.f32 %v228, %v228
    %v237 = vmul.f32 %v229, %v229
    %v238 = vmul.f32 %v230, %v230
    %v239 = vmul.f32 %v231, %v231
    %v240 = vmul.f32 %v232, %v232
    %v241 = vmul.f32 %v233, %v233
    %v242 = vmul.f32 %v234, %v234
    %v243 = vmul.f32 %v235, %v235
    %v244 = vadd.f32 %v236, %v237
    %v245 = vadd.f32 %v244, %v238
    %v246 = vadd.f32 %v245, %v239
    %v247 = vadd.f32 %v246, %v240
    %v248 = vadd.f32 %v247, %v241
    %v249 = vadd.f32 %v248, %v242
    %v250 = vadd.f32 %v249, %v243
    %v251 = vrot.slane %v250, 4
    %v252 = vadd.f32 %v250, %v251
    %v253 = vrot.slane %v252, 2
    %v254 = vadd.f32 %v252, %v253
    %v255 = vrot.slane %v254, 1
    %v256 = vadd.f32 %v254, %v255
    %v257 = vmax.f32 %v256, 1e-16
    %v258 = vrsqrt.pop %v257
    %v259 = vmul.f32 %v258, 10.0
    %v260 = vld [vmem:[%s2] sm:$0xff]
    %v261 = vld [vmem:[%s2 + $0x8] sm:$0xff]
    %v262 = vld [vmem:[%s2 + $0x10] sm:$0xff]
    %v263 = vld [vmem:[%s2 + $0x18] sm:$0xff]
    %v264 = vld [vmem:[%s2 + $0x20] sm:$0xff]
    %v265 = vld [vmem:[%s2 + $0x28] sm:$0xff]
    %v266 = vld [vmem:[%s2 + $0x30] sm:$0xff]
    %v267 = vld [vmem:[%s2 + $0x38] sm:$0xff]
    %v268 = vld [vmem:[%s2 + $0x40] sm:$0xff]
    %v269 = vld [vmem:[%s2 + $0x48] sm:$0x7]
    %v270 = vmul.f32 %v260, %v260
    %v271 = vmul.f32 %v261, %v261
    %v272 = vmul.f32 %v262, %v262
    %v273 = vmul.f32 %v263, %v263
    %v274 = vmul.f32 %v264, %v264
    %v275 = vmul.f32 %v265, %v265
    %v276 = vmul.f32 %v266, %v266
    %v277 = vmul.f32 %v267, %v267
    %v278 = vmul.f32 %v268, %v268
    %v279 = vmul.f32 %v269, %v269
    %vm280 = vcmask 523264
    %v281 = vsel %vm280, %v270, 0.0
    %282 = vadd.xlane.f32.xlu0 %v281
    %v283 = vpop.xlane.xlu0 %282
    %v284 = vsel %vm280, %v271, 0.0
    %285 = vadd.xlane.f32.xlu0 %v284
    %v286 = vpop.xlane.xlu0 %285
    %v287 = vsel %vm280, %v272, 0.0
    %288 = vadd.xlane.f32.xlu0 %v287
    %v289 = vpop.xlane.xlu0 %288
    %v290 = vsel %vm280, %v273, 0.0
    %291 = vadd.xlane.f32.xlu0 %v290
    %v292 = vpop.xlane.xlu0 %291
    %v293 = vsel %vm280, %v274, 0.0
    %294 = vadd.xlane.f32.xlu0 %v293
    %v295 = vpop.xlane.xlu0 %294
    %v296 = vsel %vm280, %v275, 0.0
    %297 = vadd.xlane.f32.xlu0 %v296
    %v298 = vpop.xlane.xlu0 %297
    %v299 = vsel %vm280, %v276, 0.0
    %300 = vadd.xlane.f32.xlu0 %v299
    %v301 = vpop.xlane.xlu0 %300
    %v302 = vsel %vm280, %v277, 0.0
    %303 = vadd.xlane.f32.xlu0 %v302
    %v304 = vpop.xlane.xlu0 %303
    %v305 = vsel %vm280, %v278, 0.0
    %306 = vadd.xlane.f32.xlu0 %v305
    %v307 = vpop.xlane.xlu0 %306
    %vm308 = vcmask 518144
    %v309 = vsel %vm308, %v279, 0.0
    %310 = vadd.xlane.f32.xlu0 %v309
    %v311 = vpop.xlane.xlu0 %310
    %v312 = vmax.f32 %v283, 1e-16
    %v313 = vmax.f32 %v286, 1e-16
    %v314 = vmax.f32 %v289, 1e-16
    %v315 = vmax.f32 %v292, 1e-16
    %v316 = vmax.f32 %v295, 1e-16
    %v317 = vmax.f32 %v298, 1e-16
    %v318 = vmax.f32 %v301, 1e-16
    %v319 = vmax.f32 %v304, 1e-16
    %v320 = vmax.f32 %v307, 1e-16
    %v321 = vmax.f32 %v311, 1e-16
    %v322 = vrsqrt.pop %v312
    %v323 = vrsqrt.pop %v313
    %v324 = vrsqrt.pop %v314
    %v325 = vrsqrt.pop %v315
    %v326 = vrsqrt.pop %v316
    %v327 = vrsqrt.pop %v317
    %v328 = vrsqrt.pop %v318
    %v329 = vrsqrt.pop %v319
    %v330 = vrsqrt.pop %v320
    %v331 = vrsqrt.pop %v321
    %v333 = vsel %vm280, %v260, 0
    %v336 = vsel %vm280, %v261, 0
    %v339 = vsel %vm280, %v262, 0
    %v342 = vsel %vm280, %v263, 0
    %v345 = vsel %vm280, %v264, 0
    %v348 = vsel %vm280, %v265, 0
    %v351 = vsel %vm280, %v266, 0
    %v354 = vsel %vm280, %v267, 0
    %v357 = vsel %vm280, %v268, 0
    %v360 = vsel %vm280, %v269, 0
    %362 = vmatprep.subr.mxu0 0.0
    %363 = vmatpush1.msra.mxu0 %v228
    %364 = vmatprep.subr.mxu0 0.0
    %365 = vmatpush1.msra.mxu0 %v229
    %366 = vmatprep.subr.mxu0 0.0
    %367 = vmatpush1.msra.mxu0 %v230
    %368 = vmatprep.subr.mxu0 0.0
    %369 = vmatpush1.msra.mxu0 %v231
    %370 = vmatprep.subr.mxu0 0.0
    %371 = vmatpush1.msra.mxu0 %v232
    %372 = vmatprep.subr.mxu0 0.0
    %373 = vmatpush1.msra.mxu0 %v233
    %374 = vmatprep.subr.mxu0 0.0
    %375 = vmatpush1.msra.mxu0 %v234
    %376 = vmatprep.subr.mxu0 0.0
    %377 = vmatpush1.msra.mxu0 %v235
    %378 = vmatprep.subr.mxu0 0.0
    %379 = vmatpush1.msra.mxu0 0.0
    %380 = vmatprep.subr.mxu0 0.0
    %381 = vmatpush1.msra.mxu0 0.0
    %382 = vmatprep.subr.mxu0 0.0
    %383 = vmatpush1.msra.mxu0 0.0
    %384 = vmatprep.subr.mxu0 0.0
    %385 = vmatpush1.msra.mxu0 0.0
    %386 = vmatprep.subr.mxu0 0.0
    %387 = vmatpush1.msra.mxu0 0.0
    %388 = vmatprep.subr.mxu0 0.0
    %389 = vmatpush1.msra.mxu0 0.0
    %390 = vmatprep.subr.mxu0 0.0
    %391 = vmatpush1.msra.mxu0 0.0
    %392 = vmatprep.subr.mxu0 0.0
    %393 = vmatpush1.msra.mxu0 0.0
    %394 = vmatprep.subr.mxu0 0.0
    %395 = vmatpush1.msra.mxu0 0.0
    %396 = vmatprep.subr.mxu0 0.0
    %397 = vmatpush1.msra.mxu0 0.0
    %398 = vmatprep.subr.mxu0 0.0
    %399 = vmatpush1.msra.mxu0 0.0
    %400 = vmatprep.subr.mxu0 0.0
    %401 = vmatpush1.msra.mxu0 0.0
    %402 = vmatprep.subr.mxu0 0.0
    %403 = vmatpush1.msra.mxu0 0.0
    %404 = vmatprep.subr.mxu0 0.0
    %405 = vmatpush1.msra.mxu0 0.0
    %406 = vmatprep.subr.mxu0 0.0
    %407 = vmatpush1.msra.mxu0 0.0
    %408 = vmatprep.subr.mxu0 0.0
    %409 = vmatpush1.msra.mxu0 0.0
    %410 = vmatprep.subr.mxu0 0.0
    %411 = vmatpush1.msra.mxu0 0.0
    %412 = vmatprep.subr.mxu0 0.0
    %413 = vmatpush1.msra.mxu0 0.0
    %414 = vmatprep.subr.mxu0 0.0
    %415 = vmatpush1.msra.mxu0 0.0
    %416 = vmatprep.subr.mxu0 0.0
    %417 = vmatpush1.msra.mxu0 0.0
    %418 = vmatprep.subr.mxu0 0.0
    %419 = vmatpush1.msra.mxu0 0.0
    %420 = vmatprep.subr.mxu0 0.0
    %421 = vmatpush1.msra.mxu0 0.0
    %422 = vmatprep.subr.mxu0 0.0
    %423 = vmatpush1.msra.mxu0 0.0
    %424 = vmatprep.subr.mxu0 0.0
    %425 = vmatpush1.msra.mxu0 0.0
    %426 = vmatprep.mubr.f32.mxu0 0.0
    %427 = vmatmul.mubr.f32.gmra.mrb[0].mxu0 %v333
    %v428 = vpop.f32.mrb[0].mxu0
    %v429 = vadd.f32 0.0, %v428
    %v430 = vpop.f32.mrb[0].mxu0
    %431 = vmatprep.mubr.f32.mxu0 0.0
    %432 = vmatmul.mubr.f32.gmra.mrb[0].mxu0 %v336
    %v433 = vpop.f32.mrb[0].mxu0
    %v434 = vadd.f32 0.0, %v433
    %v435 = vpop.f32.mrb[0].mxu0
    %436 = vmatprep.mubr.f32.mxu0 0.0
    %437 = vmatmul.mubr.f32.gmra.mrb[0].mxu0 %v339
    %v438 = vpop.f32.mrb[0].mxu0
    %v439 = vadd.f32 0.0, %v438
    %v440 = vpop.f32.mrb[0].mxu0
    %441 = vmatprep.mubr.f32.mxu0 0.0
    %442 = vmatmul.mubr.f32.gmra.mrb[0].mxu0 %v342
    %v443 = vpop.f32.mrb[0].mxu0
    %v444 = vadd.f32 0.0, %v443
    %v445 = vpop.f32.mrb[0].mxu0
    %446 = vmatprep.mubr.f32.mxu0 0.0
    %447 = vmatmul.mubr.f32.gmra.mrb[0].mxu0 %v345
    %v448 = vpop.f32.mrb[0].mxu0
    %v449 = vadd.f32 0.0, %v448
    %v450 = vpop.f32.mrb[0].mxu0
    %451 = vmatprep.mubr.f32.mxu0 0.0
    %452 = vmatmul.mubr.f32.gmra.mrb[0].mxu0 %v348
    %v453 = vpop.f32.mrb[0].mxu0
    %v454 = vadd.f32 0.0, %v453
    %v455 = vpop.f32.mrb[0].mxu0
    %456 = vmatprep.mubr.f32.mxu0 0.0
    %457 = vmatmul.mubr.f32.gmra.mrb[0].mxu0 %v351
    %v458 = vpop.f32.mrb[0].mxu0
    %v459 = vadd.f32 0.0, %v458
    %v460 = vpop.f32.mrb[0].mxu0
    %461 = vmatprep.mubr.f32.mxu0 0.0
    %462 = vmatmul.mubr.f32.gmra.mrb[0].mxu0 %v354
    %v463 = vpop.f32.mrb[0].mxu0
    %v464 = vadd.f32 0.0, %v463
    %v465 = vpop.f32.mrb[0].mxu0
    %466 = vmatprep.mubr.f32.mxu0 0.0
    %467 = vmatmul.mubr.f32.gmra.mrb[0].mxu0 %v357
    %v468 = vpop.f32.mrb[0].mxu0
    %v469 = vadd.f32 0.0, %v468
    %v470 = vpop.f32.mrb[0].mxu0
    %471 = vmatprep.mubr.f32.mxu0 0.0
    %472 = vmatmul.mubr.f32.gmra.mrb[0].mxu0 %v360
    %v473 = vpop.f32.mrb[0].mxu0
    %v474 = vadd.f32 0.0, %v473
    %v475 = vpop.f32.mrb[0].mxu0
    %476 = vdwg.mxu0
    %v477 = vmul.f32 %v429, %v322
    %v478 = vmul.f32 %v434, %v323
    %v479 = vmul.f32 %v439, %v324
    %v480 = vmul.f32 %v444, %v325
    %v481 = vmul.f32 %v449, %v326
    %v482 = vmul.f32 %v454, %v327
    %v483 = vmul.f32 %v459, %v328
    %v484 = vmul.f32 %v464, %v329
    %v485 = vmul.f32 %v469, %v330
    %v486 = vmul.f32 %v474, %v331
    %v487 = vmul.f32 %v477, %v259
    %v488 = vmul.f32 %v478, %v259
    %v489 = vmul.f32 %v479, %v259
    %v490 = vmul.f32 %v480, %v259
    %v491 = vmul.f32 %v481, %v259
    %v492 = vmul.f32 %v482, %v259
    %v493 = vmul.f32 %v483, %v259
    %v494 = vmul.f32 %v484, %v259
    %v495 = vmul.f32 %v485, %v259
    %v496 = vmul.f32 %v486, %v259
    %497 = vst [vmem:[#allocation2] sm:$0xff] %v487
    %498 = vst [vmem:[#allocation2 + $0x8] sm:$0xff] %v488
    %499 = vst [vmem:[#allocation2 + $0x10] sm:$0xff] %v489
    %500 = vst [vmem:[#allocation2 + $0x18] sm:$0xff] %v490
    %501 = vst [vmem:[#allocation2 + $0x20] sm:$0xff] %v491
    %502 = vst [vmem:[#allocation2 + $0x28] sm:$0xff] %v492
    %503 = vst [vmem:[#allocation2 + $0x30] sm:$0xff] %v493
    %504 = vst [vmem:[#allocation2 + $0x38] sm:$0xff] %v494
    %505 = vst [vmem:[#allocation2 + $0x40] sm:$0xff] %v495
    %506 = vst [vmem:[#allocation2 + $0x48] sm:$0x7] %v496
    // Predicated region
    $region14: #{tpu_custom_call.1} parent=1 // pred_check
      _
    $region15: #{tpu_custom_call.1} parent=1 // pred_check_branch
      %508 = sbr.rel (0) target = $region17
    $region16: #{tpu_custom_call.1} parent=1 // pred_region
      %s510 = ssub.s32 1280, 1280
      %511 = vsyncadd [#allocation3], %s510
      %s512 = sshll.u32 [#allocation2], 4
      %s513 = int_to_ptr.vmem [resolvable:$true] %s512
      %518 = dma.vmem_to_hbm [thread:$0]  %s513, 1280, %s3, [#allocation3], 128, 128, 8
    $region17: #{tpu_custom_call.1} parent=1 // pred_fallthru
      _
    // Predicated region
    $region18: #{tpu_custom_call.1} parent=1 // pred_check
      _
    $region19: #{tpu_custom_call.1} parent=1 // pred_check_branch
      %520 = sbr.rel (0) target = $region21
    $region20: #{tpu_custom_call.1} parent=1 // pred_region
      %521 = dma.done [#allocation3], 1280
    $region21: #{tpu_custom_call.1} parent=1 // pred_fallthru
      _
    %522 = vsyncpa [#allocation3], 1

</llo_original>
